<compile_context>
chip_gen: v6e
topology: v6e:2x2x1
jax: 0.10.0
libtpu: 0.0.40
codegen_flags: <defaults>
</compile_context>

<pallas_src>
import functools

import jax
import jax.numpy as jnp
from jax.experimental import pallas as pl
from jax.experimental.pallas import tpu as pltpu


def _round_up(x: int, m: int) -> int:
    return ((x + m - 1) // m) * m


def _cdiv(a: int, b: int) -> int:
    return (a + b - 1) // b


def _choose_tiling(B: int, block_batch: int):
    """Pick (TB, B_pad): one big step for small batches, an even number of
    large steps for big batches (v7x megacore sharding; minimal step overhead
    on single-TC v5e/v6e)."""
    B8 = _round_up(B, 8)
    if B8 <= max(8, block_batch // 2):
        return B8, B8                      # single grid step
    n_steps = _round_up(max(_cdiv(B8, block_batch), 2), 2)   # even #steps
    TB = _round_up(_cdiv(B8, n_steps), 8)
    return TB, TB * n_steps


def policy_net_kernel(x_ref, w1_ref, b1_ref, w2_ref, b2_ref, out_ref):
    # ---- fc1 + ReLU (f32, HIGHEST-precision MXU) ----
    h = jnp.dot(x_ref[...], w1_ref[...],
                preferred_element_type=jnp.float32,
                precision=jax.lax.Precision.HIGHEST)          # (TB, H)
    h = jnp.maximum(h + b1_ref[...], 0.0)

    # ---- fc2: logits over the real A action lanes only ----
    logits = jnp.dot(h, w2_ref[...],
                     preferred_element_type=jnp.float32,
                     precision=jax.lax.Precision.HIGHEST)     # (TB, A)
    logits = logits + b2_ref[...]

    # ---- numerically stable softmax over dim=1 (exact divide) ----
    m = jnp.max(logits, axis=-1, keepdims=True)
    e = jnp.exp(logits - m)
    out_ref[...] = (e / jnp.sum(e, axis=-1, keepdims=True)).astype(out_ref.dtype)


@functools.partial(jax.jit, static_argnames=("block_batch",))
def policy_net_forward(state, w1, b1, w2, b2, block_batch=1024):
    """Fused PolicyNet forward.

    state: (B, S) f32;  w1: (S, H);  b1: (1, H);  w2: (H, A);  b2: (1, A)
    Returns softmax action probabilities of shape (B, A), f32.
    """
    B, S = state.shape
    H, A = w2.shape

    TB, B_pad = _choose_tiling(B, block_batch)
    xp = state if B_pad == B else jnp.pad(state, ((0, B_pad - B), (0, 0)))

    grid = (B_pad // TB,)

    out = pl.pallas_call(
        policy_net_kernel,
        out_shape=jax.ShapeDtypeStruct((B_pad, A), jnp.float32),
        grid=grid,
        in_specs=[
            pl.BlockSpec((TB, S), lambda i: (i, 0)),          # state: tiled over batch
            pl.BlockSpec((S, H), lambda i: (0, 0)),           # w1: pinned in VMEM
            pl.BlockSpec((1, H), lambda i: (0, 0)),           # b1
            pl.BlockSpec((H, A), lambda i: (0, 0)),           # w2
            pl.BlockSpec((1, A), lambda i: (0, 0)),           # b2
        ],
        out_specs=pl.BlockSpec((TB, A), lambda i: (i, 0)),    # unpadded (TB, A) tile
        compiler_params=pltpu.CompilerParams(
            dimension_semantics=("parallel",),                # v7x: shard batch over both TCs
        ),
    )(xp, w1, b1, w2, b2)

    return out if B_pad == B else out[:B]


def policy_net_reference(state, w1, b1, w2, b2):
    """Pure-JAX f32 reference matching the PyTorch module semantics."""
    h = jax.nn.relu(
        jnp.dot(state, w1, precision=jax.lax.Precision.HIGHEST) + b1)
    logits = jnp.dot(h, w2, precision=jax.lax.Precision.HIGHEST) + b2
    return jax.nn.softmax(logits, axis=1)


def init_policy_net_params(key, state_dim, hidden_dim, action_dim):
    """Deterministic init mimicking PyTorch nn.Linear default:
    U(-1/sqrt(fan_in), 1/sqrt(fan_in)); weights stored (in_features, out_features)."""
    k1, k2, k3, k4 = jax.random.split(key, 4)
    bound1 = 1.0 / jnp.sqrt(jnp.float32(state_dim))
    bound2 = 1.0 / jnp.sqrt(jnp.float32(hidden_dim))
    w1 = jax.random.uniform(k1, (state_dim, hidden_dim), jnp.float32, -bound1, bound1)
    b1 = jax.random.uniform(k2, (1, hidden_dim), jnp.float32, -bound1, bound1)
    w2 = jax.random.uniform(k3, (hidden_dim, action_dim), jnp.float32, -bound2, bound2)
    b2 = jax.random.uniform(k4, (1, action_dim), jnp.float32, -bound2, bound2)
    return w1, b1, w2, b2


if __name__ == "__main__":
    state_dim, hidden_dim, action_dim = 4, 32, 8

    key = jax.random.PRNGKey(0)
    k_params, k_small, k_big = jax.random.split(key, 3)
    w1, b1, w2, b2 = init_policy_net_params(k_params, state_dim, hidden_dim, action_dim)

    # (1) spec-sized input (batch=2): single-step grid, exercises row padding.
    state_small = jax.random.normal(k_small, (2, state_dim), jnp.float32)
    probs_small = jax.block_until_ready(policy_net_forward(state_small, w1, b1, w2, b2))

    # (2) amortized batch: 1024 env states -> 2 grid steps of 512 rows
    #     (no pad, no slice; even grid so v7x can use both TensorCores).
    state_big = jax.random.normal(k_big, (1024, state_dim), jnp.float32)
    probs_big = jax.block_until_ready(policy_net_forward(state_big, w1, b1, w2, b2))

    for state, probs in ((state_small, probs_small), (state_big, probs_big)):
        ref = policy_net_reference(state, w1, b1, w2, b2)
        assert probs.shape == ref.shape
        # Exact-divide f32 softmax: rows sum to 1 to f32 precision.
        assert bool(jnp.all(jnp.abs(jnp.sum(probs, axis=1) - 1.0) < 1e-5))
        # Match the f32 reference tightly (f32 HIGHEST-precision matmuls).
        assert bool(jnp.all(jnp.abs(probs - ref) < 1e-5))

    print("KERNEL_OK")
</pallas_src>

<mosaic_0001>
module attributes {stable_mosaic.version = 11 : i64} {
  func.func @policy_net_kernel(%arg0: i32, %arg1: memref<8x4xf32, #tpu.memory_space<vmem>>, %arg2: memref<4x32xf32, #tpu.memory_space<vmem>>, %arg3: memref<1x32xf32, #tpu.memory_space<vmem>>, %arg4: memref<32x8xf32, #tpu.memory_space<vmem>>, %arg5: memref<1x8xf32, #tpu.memory_space<vmem>>, %arg6: memref<8x8xf32, #tpu.memory_space<vmem>>) attributes {dimension_semantics = [#tpu.dimension_semantics<parallel>], iteration_bounds = array<i64: 1>, scalar_prefetch = 0 : i64, scratch_operands = 0 : i64, tpu.core_type = #tpu.core_type<tc>, window_params = [{transform_indices = @transform_0, window_bounds = array<i64: 8, 4>}, {pipeline_mode = #tpu.pipeline_mode<synchronous>, transform_indices = @transform_1, window_bounds = array<i64: 4, 32>}, {pipeline_mode = #tpu.pipeline_mode<synchronous>, transform_indices = @transform_2, window_bounds = array<i64: 1, 32>}, {pipeline_mode = #tpu.pipeline_mode<synchronous>, transform_indices = @transform_3, window_bounds = array<i64: 32, 8>}, {pipeline_mode = #tpu.pipeline_mode<synchronous>, transform_indices = @transform_4, window_bounds = array<i64: 1, 8>}, {transform_indices = @transform_5, window_bounds = array<i64: 8, 8>}]} {
    %c0 = arith.constant 0 : index
    %c0_0 = arith.constant 0 : index
    %0 = vector.load %arg1[%c0, %c0_0] : memref<8x4xf32, #tpu.memory_space<vmem>>, vector<8x4xf32>
    %c0_1 = arith.constant 0 : index
    %c0_2 = arith.constant 0 : index
    %1 = vector.load %arg2[%c0_1, %c0_2] : memref<4x32xf32, #tpu.memory_space<vmem>>, vector<4x32xf32>
    %cst = arith.constant dense<0.000000e+00> : vector<8x32xf32>
    %2 = tpu.matmul %0, %1, %cst {dimension_numbers = #tpu.dot_dimension_numbers<[1], [0], [0], [1], [0, 0, 1, 1], [], []>, precision = #tpu.contract_precision<fp32>} : vector<8x4xf32>, vector<4x32xf32>, vector<8x32xf32> -> vector<8x32xf32>
    %c0_3 = arith.constant 0 : index
    %c0_4 = arith.constant 0 : index
    %3 = vector.load %arg3[%c0_3, %c0_4] : memref<1x32xf32, #tpu.memory_space<vmem>>, vector<1x32xf32>
    %4 = vector.broadcast %3 : vector<1x32xf32> to vector<8x32xf32>
    %5 = arith.addf %2, %4 : vector<8x32xf32>
    %cst_5 = arith.constant 0.000000e+00 : f32
    %6 = vector.broadcast %cst_5 : f32 to vector<8x32xf32>
    %7 = arith.maximumf %5, %6 : vector<8x32xf32>
    %c0_6 = arith.constant 0 : index
    %c0_7 = arith.constant 0 : index
    %8 = vector.load %arg4[%c0_6, %c0_7] : memref<32x8xf32, #tpu.memory_space<vmem>>, vector<32x8xf32>
    %cst_8 = arith.constant dense<0.000000e+00> : vector<8x8xf32>
    %9 = tpu.matmul %7, %8, %cst_8 {dimension_numbers = #tpu.dot_dimension_numbers<[1], [0], [0], [1], [0, 0, 1, 1], [], []>, precision = #tpu.contract_precision<fp32>} : vector<8x32xf32>, vector<32x8xf32>, vector<8x8xf32> -> vector<8x8xf32>
    %c0_9 = arith.constant 0 : index
    %c0_10 = arith.constant 0 : index
    %10 = vector.load %arg5[%c0_9, %c0_10] : memref<1x8xf32, #tpu.memory_space<vmem>>, vector<1x8xf32>
    %11 = vector.broadcast %10 : vector<1x8xf32> to vector<8x8xf32>
    %12 = arith.addf %9, %11 : vector<8x8xf32>
    %cst_11 = arith.constant dense<0xFF800000> : vector<8xf32>
    %13 = vector.multi_reduction <maximumf>, %12, %cst_11 [1] : vector<8x8xf32> to vector<8xf32>
    %14 = vector.shape_cast %13 : vector<8xf32> to vector<8x1xf32>
    %15 = vector.broadcast %14 : vector<8x1xf32> to vector<8x8xf32>
    %16 = arith.subf %12, %15 : vector<8x8xf32>
    %17 = math.exp %16 : vector<8x8xf32>
    %cst_12 = arith.constant dense<0.000000e+00> : vector<8xf32>
    %18 = vector.multi_reduction <add>, %17, %cst_12 [1] : vector<8x8xf32> to vector<8xf32>
    %19 = vector.shape_cast %18 : vector<8xf32> to vector<8x1xf32>
    %20 = vector.broadcast %19 : vector<8x1xf32> to vector<8x8xf32>
    %21 = arith.divf %17, %20 : vector<8x8xf32>
    %c0_13 = arith.constant 0 : index
    %c0_14 = arith.constant 0 : index
    %22 = vector.load %arg6[%c0_13, %c0_14] : memref<8x8xf32, #tpu.memory_space<vmem>>, vector<8x8xf32>
    tpu.vector_store %arg6[%c0_13, %c0_14], %21 {strides = array<i32>} : memref<8x8xf32, #tpu.memory_space<vmem>>, vector<8x8xf32>,
    return
  }
  func.func @transform_0(%arg0: i32) -> (i32, i32) {
    %c0_i32 = arith.constant 0 : i32
    %c0_i32_0 = arith.constant 0 : i32
    return %arg0, %c0_i32 : i32, i32
  }
  func.func @transform_1(%arg0: i32) -> (i32, i32) {
    %c0_i32 = arith.constant 0 : i32
    %c0_i32_0 = arith.constant 0 : i32
    %c0_i32_1 = arith.constant 0 : i32
    return %c0_i32, %c0_i32_0 : i32, i32
  }
  func.func @transform_2(%arg0: i32) -> (i32, i32) {
    %c0_i32 = arith.constant 0 : i32
    %c0_i32_0 = arith.constant 0 : i32
    %c0_i32_1 = arith.constant 0 : i32
    return %c0_i32, %c0_i32_0 : i32, i32
  }
  func.func @transform_3(%arg0: i32) -> (i32, i32) {
    %c0_i32 = arith.constant 0 : i32
    %c0_i32_0 = arith.constant 0 : i32
    %c0_i32_1 = arith.constant 0 : i32
    return %c0_i32, %c0_i32_0 : i32, i32
  }
  func.func @transform_4(%arg0: i32) -> (i32, i32) {
    %c0_i32 = arith.constant 0 : i32
    %c0_i32_0 = arith.constant 0 : i32
    %c0_i32_1 = arith.constant 0 : i32
    return %c0_i32, %c0_i32_0 : i32, i32
  }
  func.func @transform_5(%arg0: i32) -> (i32, i32) {
    %c0_i32 = arith.constant 0 : i32
    %c0_i32_0 = arith.constant 0 : i32
    return %arg0, %c0_i32 : i32, i32
  }
}

</mosaic_0001>

<llo_original>
// kernel: policy_net_forward.1
$region0: #{policy_net_forward.1}
  #allocation0 [shape = 'u32[]', space=smem, size = 0x4, offset = 0x4, fixed_abs, tag = 'smem constant byte address 0x4 - core index']
  #allocation1 [shape = 'u32[144,128]{1,0:T(1,128)}', space=vmem, size = 0x12000, scoped, tag = 'internal scratch']
  %s0 = inlined_call_operand.vmem [shape: f32[8,4], index: 0, kind: input, shape index: {}]
  %s1 = inlined_call_operand.vmem [shape: f32[4,32], index: 1, kind: input, shape index: {}]
  %s2 = inlined_call_operand.vmem [shape: f32[1,32], index: 2, kind: input, shape index: {}]
  %s3 = inlined_call_operand.vmem [shape: f32[32,8], index: 3, kind: input, shape index: {}]
  %s4 = inlined_call_operand.vmem [shape: f32[1,8], index: 4, kind: input, shape index: {}]
  %s5 = inlined_call_operand.vmem [shape: f32[8,8], index: 5, kind: output, shape index: {}]
  %s6 = sld [smem:[#allocation0]]
  $region30: #{policy_net_forward.1} parent=0
    _
  %s8 = ssub.s32 1, %s6
  %s9 = scalar_select 0, %s8, %s6
  // Predicated region
  $region2: #{policy_net_forward.1} parent=0 // pred_check
    _
  $region3: #{policy_net_forward.1} parent=0 // pred_check_branch
    %11 = sbr.rel (0) target = $region5
  $region4: #{policy_net_forward.1} parent=0 // pred_region
    _
  $region5: #{policy_net_forward.1} parent=0 // pred_fallthru
    _
  // Predicated region
  $region6: #{policy_net_forward.1} parent=0 // pred_check
    _
  $region7: #{policy_net_forward.1} parent=0 // pred_check_branch
    %13 = sbr.rel (0) target = $region9
  $region8: #{policy_net_forward.1} parent=0 // pred_region
    _
  $region9: #{policy_net_forward.1} parent=0 // pred_fallthru
    _
  // Predicated region
  $region10: #{policy_net_forward.1} parent=0 // pred_check
    _
  $region11: #{policy_net_forward.1} parent=0 // pred_check_branch
    %15 = sbr.rel (0) target = $region13
  $region12: #{policy_net_forward.1} parent=0 // pred_region
    _
  $region13: #{policy_net_forward.1} parent=0 // pred_fallthru
    _
  // Predicated region
  $region14: #{policy_net_forward.1} parent=0 // pred_check
    _
  $region15: #{policy_net_forward.1} parent=0 // pred_check_branch
    %17 = sbr.rel (0) target = $region17
  $region16: #{policy_net_forward.1} parent=0 // pred_region
    _
  $region17: #{policy_net_forward.1} parent=0 // pred_fallthru
    _
  // Predicated region
  $region18: #{policy_net_forward.1} parent=0 // pred_check
    _
  $region19: #{policy_net_forward.1} parent=0 // pred_check_branch
    %19 = sbr.rel (0) target = $region21
  $region20: #{policy_net_forward.1} parent=0 // pred_region
    _
  $region21: #{policy_net_forward.1} parent=0 // pred_fallthru
    _
  %v20 = vld [vmem:[%s0] sm:$0xff]
  %v21 = vld [vmem:[%s1] sm:$0xf]
  %v22 = vld [vmem:[%s2] sm:$0x1]
  %v24 = vlaneseq
  %v25 = vshrl.u32 %v24, 7
  %v26 = vsub.s32 0, %v25
  %v27 = vrot.slane %v22, %v26
  %vm29 = vcmask 31744
  %v31 = vsel %vm29, %v20, 0
  %vm33 = vcmask 1043456
  %v35 = vsel %vm33, %v21, 0
  %37 = vmatprep.subr.mxu0 0.0
  %38 = vmatpush1.msra.mxu0 0.0
  %39 = vmatprep.subr.mxu0 0.0
  %40 = vmatpush1.msra.mxu0 0.0
  %41 = vmatprep.subr.mxu0 0.0
  %42 = vmatpush1.msra.mxu0 0.0
  %43 = vmatprep.subr.mxu0 0.0
  %44 = vmatpush1.msra.mxu0 0.0
  %45 = vmatprep.subr.mxu0 0.0
  %46 = vmatpush1.msra.mxu0 0.0
  %47 = vmatprep.subr.mxu0 0.0
  %48 = vmatpush1.msra.mxu0 0.0
  %49 = vmatprep.subr.mxu0 0.0
  %50 = vmatpush1.msra.mxu0 0.0
  %51 = vmatprep.subr.mxu0 0.0
  %52 = vmatpush1.msra.mxu0 0.0
  %53 = vmatprep.subr.mxu0 0.0
  %54 = vmatpush1.msra.mxu0 0.0
  %55 = vmatprep.subr.mxu0 0.0
  %56 = vmatpush1.msra.mxu0 0.0
  %57 = vmatprep.subr.mxu0 0.0
  %58 = vmatpush1.msra.mxu0 0.0
  %59 = vmatprep.subr.mxu0 0.0
  %60 = vmatpush1.msra.mxu0 0.0
  %61 = vmatprep.subr.mxu0 0.0
  %62 = vmatpush1.msra.mxu0 0.0
  %63 = vmatprep.subr.mxu0 0.0
  %64 = vmatpush1.msra.mxu0 0.0
  %65 = vmatprep.subr.mxu0 0.0
  %66 = vmatpush1.msra.mxu0 0.0
  %67 = vmatprep.subr.mxu0 0.0
  %v68 = vand.u32 %v35, 4294901760
  %69 = vmatpush1.msra.mxu0 %v68
  %70 = vmatprep.subr.mxu0 0.0
  %71 = vmatpush2.msra.mxu0 0.0
  %72 = vmatprep.subr.mxu0 0.0
  %73 = vmatpush2.msra.mxu0 0.0
  %74 = vmatprep.subr.mxu0 0.0
  %75 = vmatpush2.msra.mxu0 0.0
  %76 = vmatprep.subr.mxu0 0.0
  %77 = vmatpush2.msra.mxu0 0.0
  %78 = vmatprep.subr.mxu0 0.0
  %79 = vmatpush2.msra.mxu0 0.0
  %80 = vmatprep.subr.mxu0 0.0
  %81 = vmatpush2.msra.mxu0 0.0
  %82 = vmatprep.subr.mxu0 0.0
  %83 = vmatpush2.msra.mxu0 0.0
  %84 = vmatprep.subr.mxu0 0.0
  %85 = vmatpush2.msra.mxu0 0.0
  %86 = vmatprep.subr.mxu0 0.0
  %87 = vmatpush2.msra.mxu0 0.0
  %88 = vmatprep.subr.mxu0 0.0
  %89 = vmatpush2.msra.mxu0 0.0
  %90 = vmatprep.subr.mxu0 0.0
  %91 = vmatpush2.msra.mxu0 0.0
  %92 = vmatprep.subr.mxu0 0.0
  %93 = vmatpush2.msra.mxu0 0.0
  %94 = vmatprep.subr.mxu0 0.0
  %95 = vmatpush2.msra.mxu0 0.0
  %96 = vmatprep.subr.mxu0 0.0
  %97 = vmatpush2.msra.mxu0 0.0
  %98 = vmatprep.subr.mxu0 0.0
  %99 = vmatpush2.msra.mxu0 0.0
  %100 = vmatprep.subr.mxu0 0.0
  %101 = vmatpush2.msra.mxu0 0.0
  %102 = vmatprep.mubr.f32.mxu0 0.0
  %v103 = vand.u32 %v31, 4294901760
  %v104 = vsub.f32 %v31, %v103
  %v105 = vand.u32 %v104, 4294901760
  %v106 = vsub.f32 %v104, %v105
  %v107 = vand.u32 %v106, 4294901760
  %108 = vmatmul.mubr.f32.gmra.mxu0 %v107
  %v109 = vpop.f32.mrf.mxu0
  %v110 = vadd.f32 %v27, %v109
  %v111 = vpop.f32.mrf.mxu0
  %112 = vdwg.mxu0
  %113 = vmatprep.subr.mxu0 0.0
  %114 = vmatpush1.msra.mxu0 0.0
  %115 = vmatprep.subr.mxu0 0.0
  %116 = vmatpush1.msra.mxu0 0.0
  %117 = vmatprep.subr.mxu0 0.0
  %118 = vmatpush1.msra.mxu0 0.0
  %119 = vmatprep.subr.mxu0 0.0
  %120 = vmatpush1.msra.mxu0 0.0
  %121 = vmatprep.subr.mxu0 0.0
  %122 = vmatpush1.msra.mxu0 0.0
  %123 = vmatprep.subr.mxu0 0.0
  %124 = vmatpush1.msra.mxu0 0.0
  %125 = vmatprep.subr.mxu0 0.0
  %126 = vmatpush1.msra.mxu0 0.0
  %127 = vmatprep.subr.mxu0 0.0
  %128 = vmatpush1.msra.mxu0 0.0
  %129 = vmatprep.subr.mxu0 0.0
  %130 = vmatpush1.msra.mxu0 0.0
  %131 = vmatprep.subr.mxu0 0.0
  %132 = vmatpush1.msra.mxu0 0.0
  %133 = vmatprep.subr.mxu0 0.0
  %134 = vmatpush1.msra.mxu0 0.0
  %135 = vmatprep.subr.mxu0 0.0
  %136 = vmatpush1.msra.mxu0 0.0
  %137 = vmatprep.subr.mxu0 0.0
  %138 = vmatpush1.msra.mxu0 0.0
  %139 = vmatprep.subr.mxu0 0.0
  %140 = vmatpush1.msra.mxu0 0.0
  %141 = vmatprep.subr.mxu0 0.0
  %142 = vmatpush1.msra.mxu0 0.0
  %143 = vmatprep.subr.mxu0 0.0
  %v144 = vand.u32 %v35, 4294901760
  %v145 = vsub.f32 %v35, %v144
  %v146 = vand.u32 %v145, 4294901760
  %v147 = vsub.f32 %v145, %v146
  %v148 = vand.u32 %v147, 4294901760
  %149 = vmatpush1.msra.mxu0 %v148
  %150 = vmatprep.subr.mxu0 0.0
  %151 = vmatpush2.msra.mxu0 0.0
  %152 = vmatprep.subr.mxu0 0.0
  %153 = vmatpush2.msra.mxu0 0.0
  %154 = vmatprep.subr.mxu0 0.0
  %155 = vmatpush2.msra.mxu0 0.0
  %156 = vmatprep.subr.mxu0 0.0
  %157 = vmatpush2.msra.mxu0 0.0
  %158 = vmatprep.subr.mxu0 0.0
  %159 = vmatpush2.msra.mxu0 0.0
  %160 = vmatprep.subr.mxu0 0.0
  %161 = vmatpush2.msra.mxu0 0.0
  %162 = vmatprep.subr.mxu0 0.0
  %163 = vmatpush2.msra.mxu0 0.0
  %164 = vmatprep.subr.mxu0 0.0
  %165 = vmatpush2.msra.mxu0 0.0
  %166 = vmatprep.subr.mxu0 0.0
  %167 = vmatpush2.msra.mxu0 0.0
  %168 = vmatprep.subr.mxu0 0.0
  %169 = vmatpush2.msra.mxu0 0.0
  %170 = vmatprep.subr.mxu0 0.0
  %171 = vmatpush2.msra.mxu0 0.0
  %172 = vmatprep.subr.mxu0 0.0
  %173 = vmatpush2.msra.mxu0 0.0
  %174 = vmatprep.subr.mxu0 0.0
  %175 = vmatpush2.msra.mxu0 0.0
  %176 = vmatprep.subr.mxu0 0.0
  %177 = vmatpush2.msra.mxu0 0.0
  %178 = vmatprep.subr.mxu0 0.0
  %179 = vmatpush2.msra.mxu0 0.0
  %180 = vmatprep.subr.mxu0 0.0
  %181 = vmatpush2.msra.mxu0 0.0
  %182 = vmatprep.mubr.f32.mxu0 0.0
  %v183 = vand.u32 %v31, 4294901760
  %184 = vmatmul.mubr.f32.gmra.mxu0 %v183
  %v185 = vpop.f32.mrf.mxu0
  %v186 = vadd.f32 %v110, %v185
  %v187 = vpop.f32.mrf.mxu0
  %188 = vdwg.mxu0
  %189 = vmatprep.subr.mxu0 0.0
  %190 = vmatpush1.msra.mxu0 0.0
  %191 = vmatprep.subr.mxu0 0.0
  %192 = vmatpush1.msra.mxu0 0.0
  %193 = vmatprep.subr.mxu0 0.0
  %194 = vmatpush1.msra.mxu0 0.0
  %195 = vmatprep.subr.mxu0 0.0
  %196 = vmatpush1.msra.mxu0 0.0
  %197 = vmatprep.subr.mxu0 0.0
  %198 = vmatpush1.msra.mxu0 0.0
  %199 = vmatprep.subr.mxu0 0.0
  %200 = vmatpush1.msra.mxu0 0.0
  %201 = vmatprep.subr.mxu0 0.0
  %202 = vmatpush1.msra.mxu0 0.0
  %203 = vmatprep.subr.mxu0 0.0
  %204 = vmatpush1.msra.mxu0 0.0
  %205 = vmatprep.subr.mxu0 0.0
  %206 = vmatpush1.msra.mxu0 0.0
  %207 = vmatprep.subr.mxu0 0.0
  %208 = vmatpush1.msra.mxu0 0.0
  %209 = vmatprep.subr.mxu0 0.0
  %210 = vmatpush1.msra.mxu0 0.0
  %211 = vmatprep.subr.mxu0 0.0
  %212 = vmatpush1.msra.mxu0 0.0
  %213 = vmatprep.subr.mxu0 0.0
  %214 = vmatpush1.msra.mxu0 0.0
  %215 = vmatprep.subr.mxu0 0.0
  %216 = vmatpush1.msra.mxu0 0.0
  %217 = vmatprep.subr.mxu0 0.0
  %218 = vmatpush1.msra.mxu0 0.0
  %219 = vmatprep.subr.mxu0 0.0
  %v220 = vand.u32 %v35, 4294901760
  %v221 = vsub.f32 %v35, %v220
  %222 = vmatpush1.msra.mxu0 %v221
  %223 = vmatprep.subr.mxu0 0.0
  %224 = vmatpush2.msra.mxu0 0.0
  %225 = vmatprep.subr.mxu0 0.0
  %226 = vmatpush2.msra.mxu0 0.0
  %227 = vmatprep.subr.mxu0 0.0
  %228 = vmatpush2.msra.mxu0 0.0
  %229 = vmatprep.subr.mxu0 0.0
  %230 = vmatpush2.msra.mxu0 0.0
  %231 = vmatprep.subr.mxu0 0.0
  %232 = vmatpush2.msra.mxu0 0.0
  %233 = vmatprep.subr.mxu0 0.0
  %234 = vmatpush2.msra.mxu0 0.0
  %235 = vmatprep.subr.mxu0 0.0
  %236 = vmatpush2.msra.mxu0 0.0
  %237 = vmatprep.subr.mxu0 0.0
  %238 = vmatpush2.msra.mxu0 0.0
  %239 = vmatprep.subr.mxu0 0.0
  %240 = vmatpush2.msra.mxu0 0.0
  %241 = vmatprep.subr.mxu0 0.0
  %242 = vmatpush2.msra.mxu0 0.0
  %243 = vmatprep.subr.mxu0 0.0
  %244 = vmatpush2.msra.mxu0 0.0
  %245 = vmatprep.subr.mxu0 0.0
  %246 = vmatpush2.msra.mxu0 0.0
  %247 = vmatprep.subr.mxu0 0.0
  %248 = vmatpush2.msra.mxu0 0.0
  %249 = vmatprep.subr.mxu0 0.0
  %250 = vmatpush2.msra.mxu0 0.0
  %251 = vmatprep.subr.mxu0 0.0
  %252 = vmatpush2.msra.mxu0 0.0
  %253 = vmatprep.subr.mxu0 0.0
  %254 = vmatpush2.msra.mxu0 0.0
  %255 = vmatprep.mubr.f32.mxu0 0.0
  %v256 = vand.u32 %v31, 4294901760
  %v257 = vsub.f32 %v31, %v256
  %258 = vmatmul.mubr.f32.gmra.mxu0 %v257
  %v259 = vpop.f32.mrf.mxu0
  %v260 = vadd.f32 %v186, %v259
  %v261 = vpop.f32.mrf.mxu0
  %262 = vdwg.mxu0
  %263 = vmatprep.subr.mxu0 0.0
  %264 = vmatpush1.msra.mxu0 0.0
  %265 = vmatprep.subr.mxu0 0.0
  %266 = vmatpush1.msra.mxu0 0.0
  %267 = vmatprep.subr.mxu0 0.0
  %268 = vmatpush1.msra.mxu0 0.0
  %269 = vmatprep.subr.mxu0 0.0
  %270 = vmatpush1.msra.mxu0 0.0
  %271 = vmatprep.subr.mxu0 0.0
  %272 = vmatpush1.msra.mxu0 0.0
  %273 = vmatprep.subr.mxu0 0.0
  %274 = vmatpush1.msra.mxu0 0.0
  %275 = vmatprep.subr.mxu0 0.0
  %276 = vmatpush1.msra.mxu0 0.0
  %277 = vmatprep.subr.mxu0 0.0
  %278 = vmatpush1.msra.mxu0 0.0
  %279 = vmatprep.subr.mxu0 0.0
  %280 = vmatpush1.msra.mxu0 0.0
  %281 = vmatprep.subr.mxu0 0.0
  %282 = vmatpush1.msra.mxu0 0.0
  %283 = vmatprep.subr.mxu0 0.0
  %284 = vmatpush1.msra.mxu0 0.0
  %285 = vmatprep.subr.mxu0 0.0
  %286 = vmatpush1.msra.mxu0 0.0
  %287 = vmatprep.subr.mxu0 0.0
  %288 = vmatpush1.msra.mxu0 0.0
  %289 = vmatprep.subr.mxu0 0.0
  %290 = vmatpush1.msra.mxu0 0.0
  %291 = vmatprep.subr.mxu0 0.0
  %292 = vmatpush1.msra.mxu0 0.0
  %293 = vmatprep.subr.mxu0 0.0
  %v294 = vand.u32 %v35, 4294901760
  %295 = vmatpush1.msra.mxu0 %v294
  %296 = vmatprep.subr.mxu0 0.0
  %297 = vmatpush2.msra.mxu0 0.0
  %298 = vmatprep.subr.mxu0 0.0
  %299 = vmatpush2.msra.mxu0 0.0
  %300 = vmatprep.subr.mxu0 0.0
  %301 = vmatpush2.msra.mxu0 0.0
  %302 = vmatprep.subr.mxu0 0.0
  %303 = vmatpush2.msra.mxu0 0.0
  %304 = vmatprep.subr.mxu0 0.0
  %305 = vmatpush2.msra.mxu0 0.0
  %306 = vmatprep.subr.mxu0 0.0
  %307 = vmatpush2.msra.mxu0 0.0
  %308 = vmatprep.subr.mxu0 0.0
  %309 = vmatpush2.msra.mxu0 0.0
  %310 = vmatprep.subr.mxu0 0.0
  %311 = vmatpush2.msra.mxu0 0.0
  %312 = vmatprep.subr.mxu0 0.0
  %313 = vmatpush2.msra.mxu0 0.0
  %314 = vmatprep.subr.mxu0 0.0
  %315 = vmatpush2.msra.mxu0 0.0
  %316 = vmatprep.subr.mxu0 0.0
  %317 = vmatpush2.msra.mxu0 0.0
  %318 = vmatprep.subr.mxu0 0.0
  %319 = vmatpush2.msra.mxu0 0.0
  %320 = vmatprep.subr.mxu0 0.0
  %321 = vmatpush2.msra.mxu0 0.0
  %322 = vmatprep.subr.mxu0 0.0
  %323 = vmatpush2.msra.mxu0 0.0
  %324 = vmatprep.subr.mxu0 0.0
  %325 = vmatpush2.msra.mxu0 0.0
  %326 = vmatprep.subr.mxu0 0.0
  %327 = vmatpush2.msra.mxu0 0.0
  %328 = vmatprep.mubr.f32.mxu0 0.0
  %v329 = vand.u32 %v31, 4294901760
  %v330 = vsub.f32 %v31, %v329
  %v331 = vand.u32 %v330, 4294901760
  %332 = vmatmul.mubr.f32.gmra.mxu0 %v331
  %v333 = vpop.f32.mrf.mxu0
  %v334 = vadd.f32 %v260, %v333
  %v335 = vpop.f32.mrf.mxu0
  %336 = vdwg.mxu0
  %337 = vmatprep.subr.mxu0 0.0
  %338 = vmatpush1.msra.mxu0 0.0
  %339 = vmatprep.subr.mxu0 0.0
  %340 = vmatpush1.msra.mxu0 0.0
  %341 = vmatprep.subr.mxu0 0.0
  %342 = vmatpush1.msra.mxu0 0.0
  %343 = vmatprep.subr.mxu0 0.0
  %344 = vmatpush1.msra.mxu0 0.0
  %345 = vmatprep.subr.mxu0 0.0
  %346 = vmatpush1.msra.mxu0 0.0
  %347 = vmatprep.subr.mxu0 0.0
  %348 = vmatpush1.msra.mxu0 0.0
  %349 = vmatprep.subr.mxu0 0.0
  %350 = vmatpush1.msra.mxu0 0.0
  %351 = vmatprep.subr.mxu0 0.0
  %352 = vmatpush1.msra.mxu0 0.0
  %353 = vmatprep.subr.mxu0 0.0
  %354 = vmatpush1.msra.mxu0 0.0
  %355 = vmatprep.subr.mxu0 0.0
  %356 = vmatpush1.msra.mxu0 0.0
  %357 = vmatprep.subr.mxu0 0.0
  %358 = vmatpush1.msra.mxu0 0.0
  %359 = vmatprep.subr.mxu0 0.0
  %360 = vmatpush1.msra.mxu0 0.0
  %361 = vmatprep.subr.mxu0 0.0
  %362 = vmatpush1.msra.mxu0 0.0
  %363 = vmatprep.subr.mxu0 0.0
  %364 = vmatpush1.msra.mxu0 0.0
  %365 = vmatprep.subr.mxu0 0.0
  %366 = vmatpush1.msra.mxu0 0.0
  %367 = vmatprep.subr.mxu0 0.0
  %v368 = vand.u32 %v35, 4294901760
  %v369 = vsub.f32 %v35, %v368
  %v370 = vand.u32 %v369, 4294901760
  %371 = vmatpush1.msra.mxu0 %v370
  %372 = vmatprep.subr.mxu0 0.0
  %373 = vmatpush2.msra.mxu0 0.0
  %374 = vmatprep.subr.mxu0 0.0
  %375 = vmatpush2.msra.mxu0 0.0
  %376 = vmatprep.subr.mxu0 0.0
  %377 = vmatpush2.msra.mxu0 0.0
  %378 = vmatprep.subr.mxu0 0.0
  %379 = vmatpush2.msra.mxu0 0.0
  %380 = vmatprep.subr.mxu0 0.0
  %381 = vmatpush2.msra.mxu0 0.0
  %382 = vmatprep.subr.mxu0 0.0
  %383 = vmatpush2.msra.mxu0 0.0
  %384 = vmatprep.subr.mxu0 0.0
  %385 = vmatpush2.msra.mxu0 0.0
  %386 = vmatprep.subr.mxu0 0.0
  %387 = vmatpush2.msra.mxu0 0.0
  %388 = vmatprep.subr.mxu0 0.0
  %389 = vmatpush2.msra.mxu0 0.0
  %390 = vmatprep.subr.mxu0 0.0
  %391 = vmatpush2.msra.mxu0 0.0
  %392 = vmatprep.subr.mxu0 0.0
  %393 = vmatpush2.msra.mxu0 0.0
  %394 = vmatprep.subr.mxu0 0.0
  %395 = vmatpush2.msra.mxu0 0.0
  %396 = vmatprep.subr.mxu0 0.0
  %397 = vmatpush2.msra.mxu0 0.0
  %398 = vmatprep.subr.mxu0 0.0
  %399 = vmatpush2.msra.mxu0 0.0
  %400 = vmatprep.subr.mxu0 0.0
  %401 = vmatpush2.msra.mxu0 0.0
  %402 = vmatprep.subr.mxu0 0.0
  %403 = vmatpush2.msra.mxu0 0.0
  %404 = vmatprep.mubr.f32.mxu0 0.0
  %v405 = vand.u32 %v31, 4294901760
  %406 = vmatmul.mubr.f32.gmra.mxu0 %v405
  %v407 = vpop.f32.mrf.mxu0
  %v408 = vadd.f32 %v334, %v407
  %v409 = vpop.f32.mrf.mxu0
  %410 = vdwg.mxu0
  %411 = vmatprep.subr.mxu0 0.0
  %412 = vmatpush1.msra.mxu0 0.0
  %413 = vmatprep.subr.mxu0 0.0
  %414 = vmatpush1.msra.mxu0 0.0
  %415 = vmatprep.subr.mxu0 0.0
  %416 = vmatpush1.msra.mxu0 0.0
  %417 = vmatprep.subr.mxu0 0.0
  %418 = vmatpush1.msra.mxu0 0.0
  %419 = vmatprep.subr.mxu0 0.0
  %420 = vmatpush1.msra.mxu0 0.0
  %421 = vmatprep.subr.mxu0 0.0
  %422 = vmatpush1.msra.mxu0 0.0
  %423 = vmatprep.subr.mxu0 0.0
  %424 = vmatpush1.msra.mxu0 0.0
  %425 = vmatprep.subr.mxu0 0.0
  %426 = vmatpush1.msra.mxu0 0.0
  %427 = vmatprep.subr.mxu0 0.0
  %428 = vmatpush1.msra.mxu0 0.0
  %429 = vmatprep.subr.mxu0 0.0
  %430 = vmatpush1.msra.mxu0 0.0
  %431 = vmatprep.subr.mxu0 0.0
  %432 = vmatpush1.msra.mxu0 0.0
  %433 = vmatprep.subr.mxu0 0.0
  %434 = vmatpush1.msra.mxu0 0.0
  %435 = vmatprep.subr.mxu0 0.0
  %436 = vmatpush1.msra.mxu0 0.0
  %437 = vmatprep.subr.mxu0 0.0
  %438 = vmatpush1.msra.mxu0 0.0
  %439 = vmatprep.subr.mxu0 0.0
  %440 = vmatpush1.msra.mxu0 0.0
  %441 = vmatprep.subr.mxu0 0.0
  %v442 = vand.u32 %v35, 4294901760
  %443 = vmatpush1.msra.mxu0 %v442
  %444 = vmatprep.subr.mxu0 0.0
  %445 = vmatpush2.msra.mxu0 0.0
  %446 = vmatprep.subr.mxu0 0.0
  %447 = vmatpush2.msra.mxu0 0.0
  %448 = vmatprep.subr.mxu0 0.0
  %449 = vmatpush2.msra.mxu0 0.0
  %450 = vmatprep.subr.mxu0 0.0
  %451 = vmatpush2.msra.mxu0 0.0
  %452 = vmatprep.subr.mxu0 0.0
  %453 = vmatpush2.msra.mxu0 0.0
  %454 = vmatprep.subr.mxu0 0.0
  %455 = vmatpush2.msra.mxu0 0.0
  %456 = vmatprep.subr.mxu0 0.0
  %457 = vmatpush2.msra.mxu0 0.0
  %458 = vmatprep.subr.mxu0 0.0
  %459 = vmatpush2.msra.mxu0 0.0
  %460 = vmatprep.subr.mxu0 0.0
  %461 = vmatpush2.msra.mxu0 0.0
  %462 = vmatprep.subr.mxu0 0.0
  %463 = vmatpush2.msra.mxu0 0.0
  %464 = vmatprep.subr.mxu0 0.0
  %465 = vmatpush2.msra.mxu0 0.0
  %466 = vmatprep.subr.mxu0 0.0
  %467 = vmatpush2.msra.mxu0 0.0
  %468 = vmatprep.subr.mxu0 0.0
  %469 = vmatpush2.msra.mxu0 0.0
  %470 = vmatprep.subr.mxu0 0.0
  %471 = vmatpush2.msra.mxu0 0.0
  %472 = vmatprep.subr.mxu0 0.0
  %473 = vmatpush2.msra.mxu0 0.0
  %474 = vmatprep.subr.mxu0 0.0
  %475 = vmatpush2.msra.mxu0 0.0
  %476 = vmatprep.mubr.f32.mxu0 0.0
  %v477 = vand.u32 %v31, 4294901760
  %478 = vmatmul.mubr.f32.gmra.mxu0 %v477
  %v479 = vpop.f32.mrf.mxu0
  %v480 = vadd.f32 %v408, %v479
  %v481 = vpop.f32.mrf.mxu0
  %482 = vdwg.mxu0
  %v483 = vmax.f32 %v480, 0.0
  %v484 = vld [vmem:[%s3] sm:$0xff]
  %v485 = vld [vmem:[%s3 + $0x8] sm:$0xff]
  %v486 = vld [vmem:[%s3 + $0x10] sm:$0xff]
  %v487 = vld [vmem:[%s3 + $0x18] sm:$0xff]
  %v488 = vld [vmem:[%s4] sm:$0x1]
  %v490 = vlaneseq
  %v491 = vshrl.u32 %v490, 7
  %v492 = vsub.s32 0, %v491
  %v493 = vrot.slane %v488, %v492
  %vm495 = vcmask 261120
  %v497 = vsel %vm495, %v483, 0
  %499 = vmatprep.subr.mxu0 0.0
  %500 = vmatpush1.msra.mxu0 0.0
  %501 = vmatprep.subr.mxu0 0.0
  %502 = vmatpush1.msra.mxu0 0.0
  %503 = vmatprep.subr.mxu0 0.0
  %504 = vmatpush1.msra.mxu0 0.0
  %505 = vmatprep.subr.mxu0 0.0
  %506 = vmatpush1.msra.mxu0 0.0
  %507 = vmatprep.subr.mxu0 0.0
  %508 = vmatpush1.msra.mxu0 0.0
  %509 = vmatprep.subr.mxu0 0.0
  %510 = vmatpush1.msra.mxu0 0.0
  %511 = vmatprep.subr.mxu0 0.0
  %512 = vmatpush1.msra.mxu0 0.0
  %513 = vmatprep.subr.mxu0 0.0
  %514 = vmatpush1.msra.mxu0 0.0
  %515 = vmatprep.subr.mxu0 0.0
  %516 = vmatpush1.msra.mxu0 0.0
  %517 = vmatprep.subr.mxu0 0.0
  %518 = vmatpush1.msra.mxu0 0.0
  %519 = vmatprep.subr.mxu0 0.0
  %520 = vmatpush1.msra.mxu0 0.0
  %521 = vmatprep.subr.mxu0 0.0
  %522 = vmatpush1.msra.mxu0 0.0
  %523 = vmatprep.subr.mxu0 0.0
  %v524 = vand.u32 %v487, 4294901760
  %525 = vmatpush1.msra.mxu0 %v524
  %526 = vmatprep.subr.mxu0 0.0
  %v527 = vand.u32 %v486, 4294901760
  %528 = vmatpush1.msra.mxu0 %v527
  %529 = vmatprep.subr.mxu0 0.0
  %v530 = vand.u32 %v485, 4294901760
  %531 = vmatpush1.msra.mxu0 %v530
  %532 = vmatprep.subr.mxu0 0.0
  %v533 = vand.u32 %v484, 4294901760
  %534 = vmatpush1.msra.mxu0 %v533
  %535 = vmatprep.subr.mxu0 0.0
  %536 = vmatpush2.msra.mxu0 0.0
  %537 = vmatprep.subr.mxu0 0.0
  %538 = vmatpush2.msra.mxu0 0.0
  %539 = vmatprep.subr.mxu0 0.0
  %540 = vmatpush2.msra.mxu0 0.0
  %541 = vmatprep.subr.mxu0 0.0
  %542 = vmatpush2.msra.mxu0 0.0
  %543 = vmatprep.subr.mxu0 0.0
  %544 = vmatpush2.msra.mxu0 0.0
  %545 = vmatprep.subr.mxu0 0.0
  %546 = vmatpush2.msra.mxu0 0.0
  %547 = vmatprep.subr.mxu0 0.0
  %548 = vmatpush2.msra.mxu0 0.0
  %549 = vmatprep.subr.mxu0 0.0
  %550 = vmatpush2.msra.mxu0 0.0
  %551 = vmatprep.subr.mxu0 0.0
  %552 = vmatpush2.msra.mxu0 0.0
  %553 = vmatprep.subr.mxu0 0.0
  %554 = vmatpush2.msra.mxu0 0.0
  %555 = vmatprep.subr.mxu0 0.0
  %556 = vmatpush2.msra.mxu0 0.0
  %557 = vmatprep.subr.mxu0 0.0
  %558 = vmatpush2.msra.mxu0 0.0
  %559 = vmatprep.subr.mxu0 0.0
  %560 = vmatpush2.msra.mxu0 0.0
  %561 = vmatprep.subr.mxu0 0.0
  %562 = vmatpush2.msra.mxu0 0.0
  %563 = vmatprep.subr.mxu0 0.0
  %564 = vmatpush2.msra.mxu0 0.0
  %565 = vmatprep.subr.mxu0 0.0
  %566 = vmatpush2.msra.mxu0 0.0
  %567 = vmatprep.mubr.f32.mxu0 0.0
  %v568 = vand.u32 %v497, 4294901760
  %v569 = vsub.f32 %v497, %v568
  %v570 = vand.u32 %v569, 4294901760
  %v571 = vsub.f32 %v569, %v570
  %v572 = vand.u32 %v571, 4294901760
  %573 = vmatmul.mubr.f32.gmra.mxu0 %v572
  %v574 = vpop.f32.mrf.mxu0
  %v575 = vadd.f32 %v493, %v574
  %v576 = vpop.f32.mrf.mxu0
  %577 = vdwg.mxu0
  %578 = vmatprep.subr.mxu0 0.0
  %579 = vmatpush1.msra.mxu0 0.0
  %580 = vmatprep.subr.mxu0 0.0
  %581 = vmatpush1.msra.mxu0 0.0
  %582 = vmatprep.subr.mxu0 0.0
  %583 = vmatpush1.msra.mxu0 0.0
  %584 = vmatprep.subr.mxu0 0.0
  %585 = vmatpush1.msra.mxu0 0.0
  %586 = vmatprep.subr.mxu0 0.0
  %587 = vmatpush1.msra.mxu0 0.0
  %588 = vmatprep.subr.mxu0 0.0
  %589 = vmatpush1.msra.mxu0 0.0
  %590 = vmatprep.subr.mxu0 0.0
  %591 = vmatpush1.msra.mxu0 0.0
  %592 = vmatprep.subr.mxu0 0.0
  %593 = vmatpush1.msra.mxu0 0.0
  %594 = vmatprep.subr.mxu0 0.0
  %595 = vmatpush1.msra.mxu0 0.0
  %596 = vmatprep.subr.mxu0 0.0
  %597 = vmatpush1.msra.mxu0 0.0
  %598 = vmatprep.subr.mxu0 0.0
  %599 = vmatpush1.msra.mxu0 0.0
  %600 = vmatprep.subr.mxu0 0.0
  %601 = vmatpush1.msra.mxu0 0.0
  %602 = vmatprep.subr.mxu0 0.0
  %v603 = vand.u32 %v487, 4294901760
  %v604 = vsub.f32 %v487, %v603
  %v605 = vand.u32 %v604, 4294901760
  %v606 = vsub.f32 %v604, %v605
  %v607 = vand.u32 %v606, 4294901760
  %608 = vmatpush1.msra.mxu0 %v607
  %609 = vmatprep.subr.mxu0 0.0
  %v610 = vand.u32 %v486, 4294901760
  %v611 = vsub.f32 %v486, %v610
  %v612 = vand.u32 %v611, 4294901760
  %v613 = vsub.f32 %v611, %v612
  %v614 = vand.u32 %v613, 4294901760
  %615 = vmatpush1.msra.mxu0 %v614
  %616 = vmatprep.subr.mxu0 0.0
  %v617 = vand.u32 %v485, 4294901760
  %v618 = vsub.f32 %v485, %v617
  %v619 = vand.u32 %v618, 4294901760
  %v620 = vsub.f32 %v618, %v619
  %v621 = vand.u32 %v620, 4294901760
  %622 = vmatpush1.msra.mxu0 %v621
  %623 = vmatprep.subr.mxu0 0.0
  %v624 = vand.u32 %v484, 4294901760
  %v625 = vsub.f32 %v484, %v624
  %v626 = vand.u32 %v625, 4294901760
  %v627 = vsub.f32 %v625, %v626
  %v628 = vand.u32 %v627, 4294901760
  %629 = vmatpush1.msra.mxu0 %v628
  %630 = vmatprep.subr.mxu0 0.0
  %631 = vmatpush2.msra.mxu0 0.0
  %632 = vmatprep.subr.mxu0 0.0
  %633 = vmatpush2.msra.mxu0 0.0
  %634 = vmatprep.subr.mxu0 0.0
  %635 = vmatpush2.msra.mxu0 0.0
  %636 = vmatprep.subr.mxu0 0.0
  %637 = vmatpush2.msra.mxu0 0.0
  %638 = vmatprep.subr.mxu0 0.0
  %639 = vmatpush2.msra.mxu0 0.0
  %640 = vmatprep.subr.mxu0 0.0
  %641 = vmatpush2.msra.mxu0 0.0
  %642 = vmatprep.subr.mxu0 0.0
  %643 = vmatpush2.msra.mxu0 0.0
  %644 = vmatprep.subr.mxu0 0.0
  %645 = vmatpush2.msra.mxu0 0.0
  %646 = vmatprep.subr.mxu0 0.0
  %647 = vmatpush2.msra.mxu0 0.0
  %648 = vmatprep.subr.mxu0 0.0
  %649 = vmatpush2.msra.mxu0 0.0
  %650 = vmatprep.subr.mxu0 0.0
  %651 = vmatpush2.msra.mxu0 0.0
  %652 = vmatprep.subr.mxu0 0.0
  %653 = vmatpush2.msra.mxu0 0.0
  %654 = vmatprep.subr.mxu0 0.0
  %655 = vmatpush2.msra.mxu0 0.0
  %656 = vmatprep.subr.mxu0 0.0
  %657 = vmatpush2.msra.mxu0 0.0
  %658 = vmatprep.subr.mxu0 0.0
  %659 = vmatpush2.msra.mxu0 0.0
  %660 = vmatprep.subr.mxu0 0.0
  %661 = vmatpush2.msra.mxu0 0.0
  %662 = vmatprep.mubr.f32.mxu0 0.0
  %v663 = vand.u32 %v497, 4294901760
  %664 = vmatmul.mubr.f32.gmra.mxu0 %v663
  %v665 = vpop.f32.mrf.mxu0
  %v666 = vadd.f32 %v575, %v665
  %v667 = vpop.f32.mrf.mxu0
  %668 = vdwg.mxu0
  %669 = vmatprep.subr.mxu0 0.0
  %670 = vmatpush1.msra.mxu0 0.0
  %671 = vmatprep.subr.mxu0 0.0
  %672 = vmatpush1.msra.mxu0 0.0
  %673 = vmatprep.subr.mxu0 0.0
  %674 = vmatpush1.msra.mxu0 0.0
  %675 = vmatprep.subr.mxu0 0.0
  %676 = vmatpush1.msra.mxu0 0.0
  %677 = vmatprep.subr.mxu0 0.0
  %678 = vmatpush1.msra.mxu0 0.0
  %679 = vmatprep.subr.mxu0 0.0
  %680 = vmatpush1.msra.mxu0 0.0
  %681 = vmatprep.subr.mxu0 0.0
  %682 = vmatpush1.msra.mxu0 0.0
  %683 = vmatprep.subr.mxu0 0.0
  %684 = vmatpush1.msra.mxu0 0.0
  %685 = vmatprep.subr.mxu0 0.0
  %686 = vmatpush1.msra.mxu0 0.0
  %687 = vmatprep.subr.mxu0 0.0
  %688 = vmatpush1.msra.mxu0 0.0
  %689 = vmatprep.subr.mxu0 0.0
  %690 = vmatpush1.msra.mxu0 0.0
  %691 = vmatprep.subr.mxu0 0.0
  %692 = vmatpush1.msra.mxu0 0.0
  %693 = vmatprep.subr.mxu0 0.0
  %v694 = vand.u32 %v487, 4294901760
  %v695 = vsub.f32 %v487, %v694
  %696 = vmatpush1.msra.mxu0 %v695
  %697 = vmatprep.subr.mxu0 0.0
  %v698 = vand.u32 %v486, 4294901760
  %v699 = vsub.f32 %v486, %v698
  %700 = vmatpush1.msra.mxu0 %v699
  %701 = vmatprep.subr.mxu0 0.0
  %v702 = vand.u32 %v485, 4294901760
  %v703 = vsub.f32 %v485, %v702
  %704 = vmatpush1.msra.mxu0 %v703
  %705 = vmatprep.subr.mxu0 0.0
  %v706 = vand.u32 %v484, 4294901760
  %v707 = vsub.f32 %v484, %v706
  %708 = vmatpush1.msra.mxu0 %v707
  %709 = vmatprep.subr.mxu0 0.0
  %710 = vmatpush2.msra.mxu0 0.0
  %711 = vmatprep.subr.mxu0 0.0
  %712 = vmatpush2.msra.mxu0 0.0
  %713 = vmatprep.subr.mxu0 0.0
  %714 = vmatpush2.msra.mxu0 0.0
  %715 = vmatprep.subr.mxu0 0.0
  %716 = vmatpush2.msra.mxu0 0.0
  %717 = vmatprep.subr.mxu0 0.0
  %718 = vmatpush2.msra.mxu0 0.0
  %719 = vmatprep.subr.mxu0 0.0
  %720 = vmatpush2.msra.mxu0 0.0
  %721 = vmatprep.subr.mxu0 0.0
  %722 = vmatpush2.msra.mxu0 0.0
  %723 = vmatprep.subr.mxu0 0.0
  %724 = vmatpush2.msra.mxu0 0.0
  %725 = vmatprep.subr.mxu0 0.0
  %726 = vmatpush2.msra.mxu0 0.0
  %727 = vmatprep.subr.mxu0 0.0
  %728 = vmatpush2.msra.mxu0 0.0
  %729 = vmatprep.subr.mxu0 0.0
  %730 = vmatpush2.msra.mxu0 0.0
  %731 = vmatprep.subr.mxu0 0.0
  %732 = vmatpush2.msra.mxu0 0.0
  %733 = vmatprep.subr.mxu0 0.0
  %734 = vmatpush2.msra.mxu0 0.0
  %735 = vmatprep.subr.mxu0 0.0
  %736 = vmatpush2.msra.mxu0 0.0
  %737 = vmatprep.subr.mxu0 0.0
  %738 = vmatpush2.msra.mxu0 0.0
  %739 = vmatprep.subr.mxu0 0.0
  %740 = vmatpush2.msra.mxu0 0.0
  %741 = vmatprep.mubr.f32.mxu0 0.0
  %v742 = vand.u32 %v497, 4294901760
  %v743 = vsub.f32 %v497, %v742
  %744 = vmatmul.mubr.f32.gmra.mxu0 %v743
  %v745 = vpop.f32.mrf.mxu0
  %v746 = vadd.f32 %v666, %v745
  %v747 = vpop.f32.mrf.mxu0
  %748 = vdwg.mxu0
  %749 = vmatprep.subr.mxu0 0.0
  %750 = vmatpush1.msra.mxu0 0.0
  %751 = vmatprep.subr.mxu0 0.0
  %752 = vmatpush1.msra.mxu0 0.0
  %753 = vmatprep.subr.mxu0 0.0
  %754 = vmatpush1.msra.mxu0 0.0
  %755 = vmatprep.subr.mxu0 0.0
  %756 = vmatpush1.msra.mxu0 0.0
  %757 = vmatprep.subr.mxu0 0.0
  %758 = vmatpush1.msra.mxu0 0.0
  %759 = vmatprep.subr.mxu0 0.0
  %760 = vmatpush1.msra.mxu0 0.0
  %761 = vmatprep.subr.mxu0 0.0
  %762 = vmatpush1.msra.mxu0 0.0
  %763 = vmatprep.subr.mxu0 0.0
  %764 = vmatpush1.msra.mxu0 0.0
  %765 = vmatprep.subr.mxu0 0.0
  %766 = vmatpush1.msra.mxu0 0.0
  %767 = vmatprep.subr.mxu0 0.0
  %768 = vmatpush1.msra.mxu0 0.0
  %769 = vmatprep.subr.mxu0 0.0
  %770 = vmatpush1.msra.mxu0 0.0
  %771 = vmatprep.subr.mxu0 0.0
  %772 = vmatpush1.msra.mxu0 0.0
  %773 = vmatprep.subr.mxu0 0.0
  %v774 = vand.u32 %v487, 4294901760
  %775 = vmatpush1.msra.mxu0 %v774
  %776 = vmatprep.subr.mxu0 0.0
  %v777 = vand.u32 %v486, 4294901760
  %778 = vmatpush1.msra.mxu0 %v777
  %779 = vmatprep.subr.mxu0 0.0
  %v780 = vand.u32 %v485, 4294901760
  %781 = vmatpush1.msra.mxu0 %v780
  %782 = vmatprep.subr.mxu0 0.0
  %v783 = vand.u32 %v484, 4294901760
  %784 = vmatpush1.msra.mxu0 %v783
  %785 = vmatprep.subr.mxu0 0.0
  %786 = vmatpush2.msra.mxu0 0.0
  %787 = vmatprep.subr.mxu0 0.0
  %788 = vmatpush2.msra.mxu0 0.0
  %789 = vmatprep.subr.mxu0 0.0
  %790 = vmatpush2.msra.mxu0 0.0
  %791 = vmatprep.subr.mxu0 0.0
  %792 = vmatpush2.msra.mxu0 0.0
  %793 = vmatprep.subr.mxu0 0.0
  %794 = vmatpush2.msra.mxu0 0.0
  %795 = vmatprep.subr.mxu0 0.0
  %796 = vmatpush2.msra.mxu0 0.0
  %797 = vmatprep.subr.mxu0 0.0
  %798 = vmatpush2.msra.mxu0 0.0
  %799 = vmatprep.subr.mxu0 0.0
  %800 = vmatpush2.msra.mxu0 0.0
  %801 = vmatprep.subr.mxu0 0.0
  %802 = vmatpush2.msra.mxu0 0.0
  %803 = vmatprep.subr.mxu0 0.0
  %804 = vmatpush2.msra.mxu0 0.0
  %805 = vmatprep.subr.mxu0 0.0
  %806 = vmatpush2.msra.mxu0 0.0
  %807 = vmatprep.subr.mxu0 0.0
  %808 = vmatpush2.msra.mxu0 0.0
  %809 = vmatprep.subr.mxu0 0.0
  %810 = vmatpush2.msra.mxu0 0.0
  %811 = vmatprep.subr.mxu0 0.0
  %812 = vmatpush2.msra.mxu0 0.0
  %813 = vmatprep.subr.mxu0 0.0
  %814 = vmatpush2.msra.mxu0 0.0
  %815 = vmatprep.subr.mxu0 0.0
  %816 = vmatpush2.msra.mxu0 0.0
  %817 = vmatprep.mubr.f32.mxu0 0.0
  %v818 = vand.u32 %v497, 4294901760
  %v819 = vsub.f32 %v497, %v818
  %v820 = vand.u32 %v819, 4294901760
  %821 = vmatmul.mubr.f32.gmra.mxu0 %v820
  %v822 = vpop.f32.mrf.mxu0
  %v823 = vadd.f32 %v746, %v822
  %v824 = vpop.f32.mrf.mxu0
  %825 = vdwg.mxu0
  %826 = vmatprep.subr.mxu0 0.0
  %827 = vmatpush1.msra.mxu0 0.0
  %828 = vmatprep.subr.mxu0 0.0
  %829 = vmatpush1.msra.mxu0 0.0
  %830 = vmatprep.subr.mxu0 0.0
  %831 = vmatpush1.msra.mxu0 0.0
  %832 = vmatprep.subr.mxu0 0.0
  %833 = vmatpush1.msra.mxu0 0.0
  %834 = vmatprep.subr.mxu0 0.0
  %835 = vmatpush1.msra.mxu0 0.0
  %836 = vmatprep.subr.mxu0 0.0
  %837 = vmatpush1.msra.mxu0 0.0
  %838 = vmatprep.subr.mxu0 0.0
  %839 = vmatpush1.msra.mxu0 0.0
  %840 = vmatprep.subr.mxu0 0.0
  %841 = vmatpush1.msra.mxu0 0.0
  %842 = vmatprep.subr.mxu0 0.0
  %843 = vmatpush1.msra.mxu0 0.0
  %844 = vmatprep.subr.mxu0 0.0
  %845 = vmatpush1.msra.mxu0 0.0
  %846 = vmatprep.subr.mxu0 0.0
  %847 = vmatpush1.msra.mxu0 0.0
  %848 = vmatprep.subr.mxu0 0.0
  %849 = vmatpush1.msra.mxu0 0.0
  %850 = vmatprep.subr.mxu0 0.0
  %v851 = vand.u32 %v487, 4294901760
  %v852 = vsub.f32 %v487, %v851
  %v853 = vand.u32 %v852, 4294901760
  %854 = vmatpush1.msra.mxu0 %v853
  %855 = vmatprep.subr.mxu0 0.0
  %v856 = vand.u32 %v486, 4294901760
  %v857 = vsub.f32 %v486, %v856
  %v858 = vand.u32 %v857, 4294901760
  %859 = vmatpush1.msra.mxu0 %v858
  %860 = vmatprep.subr.mxu0 0.0
  %v861 = vand.u32 %v485, 4294901760
  %v862 = vsub.f32 %v485, %v861
  %v863 = vand.u32 %v862, 4294901760
  %864 = vmatpush1.msra.mxu0 %v863
  %865 = vmatprep.subr.mxu0 0.0
  %v866 = vand.u32 %v484, 4294901760
  %v867 = vsub.f32 %v484, %v866
  %v868 = vand.u32 %v867, 4294901760
  %869 = vmatpush1.msra.mxu0 %v868
  %870 = vmatprep.subr.mxu0 0.0
  %871 = vmatpush2.msra.mxu0 0.0
  %872 = vmatprep.subr.mxu0 0.0
  %873 = vmatpush2.msra.mxu0 0.0
  %874 = vmatprep.subr.mxu0 0.0
  %875 = vmatpush2.msra.mxu0 0.0
  %876 = vmatprep.subr.mxu0 0.0
  %877 = vmatpush2.msra.mxu0 0.0
  %878 = vmatprep.subr.mxu0 0.0
  %879 = vmatpush2.msra.mxu0 0.0
  %880 = vmatprep.subr.mxu0 0.0
  %881 = vmatpush2.msra.mxu0 0.0
  %882 = vmatprep.subr.mxu0 0.0
  %883 = vmatpush2.msra.mxu0 0.0
  %884 = vmatprep.subr.mxu0 0.0
  %885 = vmatpush2.msra.mxu0 0.0
  %886 = vmatprep.subr.mxu0 0.0
  %887 = vmatpush2.msra.mxu0 0.0
  %888 = vmatprep.subr.mxu0 0.0
  %889 = vmatpush2.msra.mxu0 0.0
  %890 = vmatprep.subr.mxu0 0.0
  %891 = vmatpush2.msra.mxu0 0.0
  %892 = vmatprep.subr.mxu0 0.0
  %893 = vmatpush2.msra.mxu0 0.0
  %894 = vmatprep.subr.mxu0 0.0
  %895 = vmatpush2.msra.mxu0 0.0
  %896 = vmatprep.subr.mxu0 0.0
  %897 = vmatpush2.msra.mxu0 0.0
  %898 = vmatprep.subr.mxu0 0.0
  %899 = vmatpush2.msra.mxu0 0.0
  %900 = vmatprep.subr.mxu0 0.0
  %901 = vmatpush2.msra.mxu0 0.0
  %902 = vmatprep.mubr.f32.mxu0 0.0
  %v903 = vand.u32 %v497, 4294901760
  %904 = vmatmul.mubr.f32.gmra.mxu0 %v903
  %v905 = vpop.f32.mrf.mxu0
  %v906 = vadd.f32 %v823, %v905
  %v907 = vpop.f32.mrf.mxu0
  %908 = vdwg.mxu0
  %909 = vmatprep.subr.mxu0 0.0
  %910 = vmatpush1.msra.mxu0 0.0
  %911 = vmatprep.subr.mxu0 0.0
  %912 = vmatpush1.msra.mxu0 0.0
  %913 = vmatprep.subr.mxu0 0.0
  %914 = vmatpush1.msra.mxu0 0.0
  %915 = vmatprep.subr.mxu0 0.0
  %916 = vmatpush1.msra.mxu0 0.0
  %917 = vmatprep.subr.mxu0 0.0
  %918 = vmatpush1.msra.mxu0 0.0
  %919 = vmatprep.subr.mxu0 0.0
  %920 = vmatpush1.msra.mxu0 0.0
  %921 = vmatprep.subr.mxu0 0.0
  %922 = vmatpush1.msra.mxu0 0.0
  %923 = vmatprep.subr.mxu0 0.0
  %924 = vmatpush1.msra.mxu0 0.0
  %925 = vmatprep.subr.mxu0 0.0
  %926 = vmatpush1.msra.mxu0 0.0
  %927 = vmatprep.subr.mxu0 0.0
  %928 = vmatpush1.msra.mxu0 0.0
  %929 = vmatprep.subr.mxu0 0.0
  %930 = vmatpush1.msra.mxu0 0.0
  %931 = vmatprep.subr.mxu0 0.0
  %932 = vmatpush1.msra.mxu0 0.0
  %933 = vmatprep.subr.mxu0 0.0
  %v934 = vand.u32 %v487, 4294901760
  %935 = vmatpush1.msra.mxu0 %v934
  %936 = vmatprep.subr.mxu0 0.0
  %v937 = vand.u32 %v486, 4294901760
  %938 = vmatpush1.msra.mxu0 %v937
  %939 = vmatprep.subr.mxu0 0.0
  %v940 = vand.u32 %v485, 4294901760
  %941 = vmatpush1.msra.mxu0 %v940
  %942 = vmatprep.subr.mxu0 0.0
  %v943 = vand.u32 %v484, 4294901760
  %944 = vmatpush1.msra.mxu0 %v943
  %945 = vmatprep.subr.mxu0 0.0
  %946 = vmatpush2.msra.mxu0 0.0
  %947 = vmatprep.subr.mxu0 0.0
  %948 = vmatpush2.msra.mxu0 0.0
  %949 = vmatprep.subr.mxu0 0.0
  %950 = vmatpush2.msra.mxu0 0.0
  %951 = vmatprep.subr.mxu0 0.0
  %952 = vmatpush2.msra.mxu0 0.0
  %953 = vmatprep.subr.mxu0 0.0
  %954 = vmatpush2.msra.mxu0 0.0
  %955 = vmatprep.subr.mxu0 0.0
  %956 = vmatpush2.msra.mxu0 0.0
  %957 = vmatprep.subr.mxu0 0.0
  %958 = vmatpush2.msra.mxu0 0.0
  %959 = vmatprep.subr.mxu0 0.0
  %960 = vmatpush2.msra.mxu0 0.0
  %961 = vmatprep.subr.mxu0 0.0
  %962 = vmatpush2.msra.mxu0 0.0
  %963 = vmatprep.subr.mxu0 0.0
  %964 = vmatpush2.msra.mxu0 0.0
  %965 = vmatprep.subr.mxu0 0.0
  %966 = vmatpush2.msra.mxu0 0.0
  %967 = vmatprep.subr.mxu0 0.0
  %968 = vmatpush2.msra.mxu0 0.0
  %969 = vmatprep.subr.mxu0 0.0
  %970 = vmatpush2.msra.mxu0 0.0
  %971 = vmatprep.subr.mxu0 0.0
  %972 = vmatpush2.msra.mxu0 0.0
  %973 = vmatprep.subr.mxu0 0.0
  %974 = vmatpush2.msra.mxu0 0.0
  %975 = vmatprep.subr.mxu0 0.0
  %976 = vmatpush2.msra.mxu0 0.0
  %977 = vmatprep.mubr.f32.mxu0 0.0
  %v978 = vand.u32 %v497, 4294901760
  %979 = vmatmul.mubr.f32.gmra.mxu0 %v978
  %v980 = vpop.f32.mrf.mxu0
  %v981 = vadd.f32 %v906, %v980
  %v982 = vpop.f32.mrf.mxu0
  %983 = vdwg.mxu0
  %vm984 = vcmask 64512
  %v985 = vsel %vm984, %v981, -inf
  %986 = vmax.xlane.f32.xlu0 %v985
  %v987 = vpop.xlane.xlu0 %986
  %v988 = vsub.f32 %v981, %v987
  %v989 = vmul.f32 %v988, 1.442695
  %v990 = vpow.pop %v989
  %v991 = vsel %vm984, %v990, 0.0
  %992 = vadd.xlane.f32.xlu0 %v991
  %v993 = vpop.xlane.xlu0 %992
  %v994 = vrcp.pop %v993
  %v995 = vmul.f32 %v990, %v994
  %996 = vst.msk [vmem:[%s5] sm:$0xff] %vm984, %v995
  // Predicated region
  $region22: #{policy_net_forward.1} parent=0 // pred_check
    _
  $region23: #{policy_net_forward.1} parent=0 // pred_check_branch
    %998 = sbr.rel (0) target = $region25
  $region24: #{policy_net_forward.1} parent=0 // pred_region
    _
  $region25: #{policy_net_forward.1} parent=0 // pred_fallthru
    _
  // Predicated region
  $region26: #{policy_net_forward.1} parent=0 // pred_check
    _
  $region27: #{policy_net_forward.1} parent=0 // pred_check_branch
    %1000 = sbr.rel (0) target = $region29
  $region28: #{policy_net_forward.1} parent=0 // pred_region
    _
  $region29: #{policy_net_forward.1} parent=0 // pred_fallthru
    _

</llo_original>
